<compile_context>
chip_gen: v5e
topology: v5e:2x2
jax: 0.10.0
libtpu: 0.0.40
codegen_flags: <defaults>
</compile_context>

<pallas_src>
import jax
import jax.numpy as jnp
from jax import lax
from jax.experimental import pallas as pl
from jax.experimental.pallas import tpu as pltpu


def sgat_kernel(x_ref, adj_ref, invdeg_ref, wf_ref, wst_ref,   # inputs
                feat_ref, scr_ref):                             # outputs
    """One grid step = all `size` SAGEAttn sub-layers on one row tile of nodes."""
    tm, cout = feat_ref.shape
    size = wf_ref.shape[1] // cout

    # --- mean aggregation over in-neighbors (done once, shared by all sub-layers) ---
    # int8 0/1 (edge-count) mask -> bf16 in VMEM, matmul accumulates in f32,
    # exact f32 1/deg row scaling afterwards.
    adj_bf = adj_ref[...].astype(jnp.float32).astype(jnp.bfloat16)        # (tm, N)
    agg = jnp.dot(adj_bf, x_ref[...], preferred_element_type=jnp.float32)  # (tm, Cin) f32
    agg = agg * invdeg_ref[...]                                            # (tm, Cin) f32

    # Row tile of x, sliced out of the resident full-x buffer (no duplicate input).
    start = pl.multiple_of(pl.program_id(0) * tm, tm)
    x_tile = x_ref[pl.ds(start, tm), :]                                    # (tm, Cin) bf16

    ax = jnp.concatenate([agg.astype(jnp.bfloat16), x_tile], axis=1)       # (tm, 2*Cin) bf16

    # --- all `size` feature transforms in ONE fused matmul ---------------------------
    #   [agg | x] @ [w_l[s]; w_r[s]]  ==  adj_mean @ (x @ w_l[s]) + x @ w_r[s]
    feat_all = jnp.dot(ax, wf_ref[...],
                       preferred_element_type=jnp.float32)                 # (tm, size*Cout)
    fl = jnp.where(feat_all >= 0, feat_all, 0.01 * feat_all)               # leaky_relu (VPU)
    acc = fl[:, 0:cout]
    for s in range(1, size):                                               # static unroll
        acc = acc + fl[:, s * cout:(s + 1) * cout]
    feat_ref[...] = acc                                                     # sum over layers

    # --- all attention projections in ONE matmul, stored lane-dense ------------------
    # scores_t[c, m] = sum_k W_score[k, c] * ax[m, k]   (A @ B^T — MXU trans_b path,
    # output rows are 128-lane dense → unmasked vst).
    scr_ref[...] = lax.dot_general(
        wst_ref[...], ax,
        dimension_numbers=(((1,), (1,)), ((), ())),
        preferred_element_type=jnp.float32)                                 # (score_w, tm)


def sgat_forward(x, edge_index, params, direction=1, tile_m=128):
    N, Cin = x.shape
    size, _, Cout = params["w_l"].shape
    src = edge_index[0]
    dst = edge_index[1]

    tm = tile_m
    num_tiles = pl.cdiv(N, tm)
    # v7x has 2 TensorCores; keep the parallel node-tile count even for balanced work.
    if num_tiles > 1 and num_tiles % 2 == 1:
        num_tiles += 1
    N_pad = num_tiles * tm
    pad = N_pad - N

    # Dense int8 edge-count adjacency (A[i, j] = #edges j->i) + exact f32 1/deg.  Glue.
    adj_cnt = jnp.zeros((N, N), jnp.float32).at[dst, src].add(1.0)
    deg = jnp.sum(adj_cnt, axis=1, keepdims=True)
    inv_deg = 1.0 / jnp.maximum(deg, 1.0)                                   # (N, 1) f32
    adj_i8 = adj_cnt.astype(jnp.int8)                                       # counts < 128

    x_p = jnp.pad(x, ((0, pad), (0, 0))).astype(jnp.bfloat16)               # (N_pad, Cin)
    adj_p = jnp.pad(adj_i8, ((0, pad), (0, pad)))                           # (N_pad, N_pad)
    invdeg_p = jnp.pad(inv_deg, ((0, pad), (0, 0))).astype(jnp.float32)     # (N_pad, 1)

    # ---- pack all sub-layers' weights once (wrapper-side, f32 math, bf16 storage) ----
    w_pack = jnp.concatenate([params["w_l"], params["w_r"]], axis=1)        # (size, 2Cin, Cout)
    w_feat = jnp.transpose(w_pack, (1, 0, 2)).reshape(2 * Cin, size * Cout)

    # Fold attention projections through the linear layer: score_s = [agg|x] @ (W_s @ a_s).
    w_src = jnp.einsum("skc,scl->ksl", w_pack, params["a_src"])[..., 0]     # (2Cin, size)
    w_dst = jnp.einsum("skc,scl->ksl", w_pack, params["a_dst"])[..., 0]     # (2Cin, size)
    w_score_t = jnp.concatenate([w_src, w_dst], axis=1).T                   # (2*size, 2Cin)
    score_w = ((2 * size + 7) // 8) * 8                                     # sublane-pad rows
    w_score_t = jnp.pad(w_score_t, ((0, score_w - 2 * size), (0, 0)))

    w_feat_bf = w_feat.astype(jnp.bfloat16)
    w_score_t_bf = w_score_t.astype(jnp.bfloat16)

    feat_sum, scores = pl.pallas_call(
        sgat_kernel,
        out_shape=(
            jax.ShapeDtypeStruct((N_pad, Cout), jnp.float32),
            jax.ShapeDtypeStruct((score_w, N_pad), jnp.float32),
        ),
        grid_spec=pltpu.PrefetchScalarGridSpec(
            num_scalar_prefetch=0,
            grid=(num_tiles,),
            in_specs=[
                pl.BlockSpec((N_pad, Cin), lambda i: (0, 0)),            # full x (resident)
                pl.BlockSpec((tm, N_pad), lambda i: (i, 0)),             # int8 adjacency row tile
                pl.BlockSpec((tm, 1), lambda i: (i, 0)),                 # f32 1/deg per row
                pl.BlockSpec((2 * Cin, size * Cout), lambda i: (0, 0)),  # packed W_feat (resident)
                pl.BlockSpec((score_w, 2 * Cin), lambda i: (0, 0)),      # packed W_score^T (resident)
            ],
            out_specs=(
                pl.BlockSpec((tm, Cout), lambda i: (i, 0)),              # summed leaky_relu features
                pl.BlockSpec((score_w, tm), lambda i: (0, i)),           # lane-dense attention scores
            ),
        ),
        compiler_params=pltpu.CompilerParams(
            dimension_semantics=("parallel",),
            vmem_limit_bytes=32 * 1024 * 1024,
        ),
    )(x_p, adj_p, invdeg_p, w_feat_bf, w_score_t_bf)

    # --- glue: per-edge attention, sum over layers, g_pooling over e_batch ---
    feat_out = feat_sum[:N]
    alpha_src = scores[:size, :N]                        # [size, N]
    alpha_dst = scores[size:2 * size, :N]                # [size, N]
    e_attn = alpha_src[:, src] + alpha_dst[:, dst]       # [size, E]
    e_attn = jnp.where(e_attn >= 0, e_attn, 0.01 * e_attn)
    attn_sum = jnp.sum(e_attn, axis=0)                   # torch.stack(dim=1) + sum(dim=1)

    # node_scores = direction * g_pooling(attn, e_batch=edge_index[0])  (scatter mean)
    seg_sum = jax.ops.segment_sum(attn_sum, src, num_segments=N)
    seg_cnt = jax.ops.segment_sum(jnp.ones_like(attn_sum), src, num_segments=N)
    node_scores = direction * seg_sum / jnp.maximum(seg_cnt, 1.0)           # [N]

    return feat_out, node_scores


def init_params(key, size, in_channel, out_channel):
    ks = jax.random.split(key, 4)
    scale = 1.0 / jnp.sqrt(jnp.float32(in_channel))
    return {
        "w_l": scale * jax.random.normal(ks[0], (size, in_channel, out_channel), jnp.float32),
        "w_r": scale * jax.random.normal(ks[1], (size, in_channel, out_channel), jnp.float32),
        "a_src": jax.random.normal(ks[2], (size, out_channel, 1), jnp.float32)
                 / jnp.sqrt(jnp.float32(out_channel)),
        "a_dst": jax.random.normal(ks[3], (size, out_channel, 1), jnp.float32)
                 / jnp.sqrt(jnp.float32(out_channel)),
    }


if __name__ == "__main__":
    key = jax.random.PRNGKey(0)
    # SGAT(size=3, in_channel=8, out_channel=16) on a 256-node graph
    # (2 node tiles of 128 -> even "parallel" tile count).
    N, C_IN, C_OUT, SIZE = 256, 8, 16, 3

    kx, kp = jax.random.split(key)
    x = jax.random.normal(kx, (N, C_IN), jnp.float32)

    # Bidirectional ring graph: every node appears as a source (edge_index[0]).
    nodes = jnp.arange(N, dtype=jnp.int32)
    src = jnp.concatenate([nodes, nodes])
    dst = jnp.concatenate([(nodes + 1) % N, (nodes - 1) % N])
    edge_index = jnp.stack([src, dst], axis=0)          # [2, E] with E = 512

    params = init_params(kp, SIZE, C_IN, C_OUT)

    feat, node_scores = sgat_forward(x, edge_index, params, direction=1, tile_m=128)
    jax.block_until_ready((feat, node_scores))

    assert feat.shape == (N, C_OUT) and node_scores.shape == (N,)
    assert bool(jnp.all(jnp.isfinite(feat))) and bool(jnp.all(jnp.isfinite(node_scores)))
    print("KERNEL_OK")
</pallas_src>

<mosaic_0001>
module attributes {stable_mosaic.version = 11 : i64} {
  func.func @sgat_kernel(%arg0: i32, %arg1: memref<256x8xbf16, #tpu.memory_space<vmem>>, %arg2: memref<128x256xi8, #tpu.memory_space<vmem>>, %arg3: memref<128x1xf32, #tpu.memory_space<vmem>>, %arg4: memref<16x48xbf16, #tpu.memory_space<vmem>>, %arg5: memref<8x16xbf16, #tpu.memory_space<vmem>>, %arg6: memref<128x16xf32, #tpu.memory_space<vmem>>, %arg7: memref<8x128xf32, #tpu.memory_space<vmem>>) attributes {dimension_semantics = [#tpu.dimension_semantics<parallel>], iteration_bounds = array<i64: 2>, scalar_prefetch = 0 : i64, scratch_operands = 0 : i64, tpu.core_type = #tpu.core_type<tc>, window_params = [{pipeline_mode = #tpu.pipeline_mode<synchronous>, transform_indices = @transform_0, window_bounds = array<i64: 256, 8>}, {transform_indices = @transform_1, window_bounds = array<i64: 128, 256>}, {transform_indices = @transform_2, window_bounds = array<i64: 128, 1>}, {pipeline_mode = #tpu.pipeline_mode<synchronous>, transform_indices = @transform_3, window_bounds = array<i64: 16, 48>}, {pipeline_mode = #tpu.pipeline_mode<synchronous>, transform_indices = @transform_4, window_bounds = array<i64: 8, 16>}, {transform_indices = @transform_5, window_bounds = array<i64: 128, 16>}, {transform_indices = @transform_6, window_bounds = array<i64: 8, 128>}]} {
    %c0 = arith.constant 0 : index
    %c0_0 = arith.constant 0 : index
    %0 = vector.load %arg2[%c0, %c0_0] : memref<128x256xi8, #tpu.memory_space<vmem>>, vector<128x256xi8>
    %1 = arith.sitofp %0 : vector<128x256xi8> to vector<128x256xf32>
    %2 = arith.truncf %1 : vector<128x256xf32> to vector<128x256xbf16>
    %c0_1 = arith.constant 0 : index
    %c0_2 = arith.constant 0 : index
    %3 = vector.load %arg1[%c0_1, %c0_2] : memref<256x8xbf16, #tpu.memory_space<vmem>>, vector<256x8xbf16>
    %cst = arith.constant dense<0.000000e+00> : vector<128x8xf32>
    %4 = tpu.matmul %2, %3, %cst {dimension_numbers = #tpu.dot_dimension_numbers<[1], [0], [0], [1], [0, 0, 1, 1], [], []>} : vector<128x256xbf16>, vector<256x8xbf16>, vector<128x8xf32> -> vector<128x8xf32>
    %c0_3 = arith.constant 0 : index
    %c0_4 = arith.constant 0 : index
    %5 = vector.load %arg3[%c0_3, %c0_4] : memref<128x1xf32, #tpu.memory_space<vmem>>, vector<128x1xf32>
    %6 = vector.broadcast %5 : vector<128x1xf32> to vector<128x8xf32>
    %7 = arith.mulf %4, %6 : vector<128x8xf32>
    %c128_i32 = arith.constant 128 : i32
    %8 = arith.muli %arg0, %c128_i32 : i32
    %9 = tpu.assume_multiple %8, 128 : i32
    %10 = arith.index_cast %9 : i32 to index
    %c0_5 = arith.constant 0 : index
    %11 = vector.load %arg1[%10, %c0_5] : memref<256x8xbf16, #tpu.memory_space<vmem>>, vector<128x8xbf16>
    %12 = arith.truncf %7 : vector<128x8xf32> to vector<128x8xbf16>
    %13 = tpu.concatenate %12, %11 in 1 : vector<128x8xbf16>, vector<128x8xbf16> -> vector<128x16xbf16>
    %c0_6 = arith.constant 0 : index
    %c0_7 = arith.constant 0 : index
    %14 = vector.load %arg4[%c0_6, %c0_7] : memref<16x48xbf16, #tpu.memory_space<vmem>>, vector<16x48xbf16>
    %cst_8 = arith.constant dense<0.000000e+00> : vector<128x48xf32>
    %15 = tpu.matmul %13, %14, %cst_8 {dimension_numbers = #tpu.dot_dimension_numbers<[1], [0], [0], [1], [0, 0, 1, 1], [], []>} : vector<128x16xbf16>, vector<16x48xbf16>, vector<128x48xf32> -> vector<128x48xf32>
    %cst_9 = arith.constant 0.000000e+00 : f32
    %16 = vector.broadcast %cst_9 : f32 to vector<128x48xf32>
    %17 = arith.cmpf oge, %15, %16 : vector<128x48xf32>
    %cst_10 = arith.constant 0.00999999977 : f32
    %18 = vector.broadcast %cst_10 : f32 to vector<128x48xf32>
    %19 = arith.mulf %18, %15 : vector<128x48xf32>
    %20 = arith.select %17, %15, %19 : vector<128x48xi1>, vector<128x48xf32>
    %21 = vector.extract_strided_slice %20 {offsets = [0, 0], sizes = [128, 16], strides = [1, 1]} : vector<128x48xf32> to vector<128x16xf32>
    %22 = vector.extract_strided_slice %20 {offsets = [0, 16], sizes = [128, 16], strides = [1, 1]} : vector<128x48xf32> to vector<128x16xf32>
    %23 = arith.addf %21, %22 : vector<128x16xf32>
    %24 = vector.extract_strided_slice %20 {offsets = [0, 32], sizes = [128, 16], strides = [1, 1]} : vector<128x48xf32> to vector<128x16xf32>
    %25 = arith.addf %23, %24 : vector<128x16xf32>
    %c0_11 = arith.constant 0 : index
    %c0_12 = arith.constant 0 : index
    %26 = vector.load %arg6[%c0_11, %c0_12] : memref<128x16xf32, #tpu.memory_space<vmem>>, vector<128x16xf32>
    tpu.vector_store %arg6[%c0_11, %c0_12], %25 {strides = array<i32>} : memref<128x16xf32, #tpu.memory_space<vmem>>, vector<128x16xf32>,
    %c0_13 = arith.constant 0 : index
    %c0_14 = arith.constant 0 : index
    %27 = vector.load %arg5[%c0_13, %c0_14] : memref<8x16xbf16, #tpu.memory_space<vmem>>, vector<8x16xbf16>
    %cst_15 = arith.constant dense<0.000000e+00> : vector<8x128xf32>
    %28 = tpu.matmul %27, %13, %cst_15 {dimension_numbers = #tpu.dot_dimension_numbers<[1], [1], [0], [0], [0, 0, 1, 0], [], []>} : vector<8x16xbf16>, vector<128x16xbf16>, vector<8x128xf32> -> vector<8x128xf32>
    %c0_16 = arith.constant 0 : index
    %c0_17 = arith.constant 0 : index
    %29 = vector.load %arg7[%c0_16, %c0_17] : memref<8x128xf32, #tpu.memory_space<vmem>>, vector<8x128xf32>
    tpu.vector_store %arg7[%c0_16, %c0_17], %28 {strides = array<i32>} : memref<8x128xf32, #tpu.memory_space<vmem>>, vector<8x128xf32>,
    return
  }
  func.func @transform_0(%arg0: i32) -> (i32, i32) {
    %c0_i32 = arith.constant 0 : i32
    %c0_i32_0 = arith.constant 0 : i32
    %c0_i32_1 = arith.constant 0 : i32
    return %c0_i32, %c0_i32_0 : i32, i32
  }
  func.func @transform_1(%arg0: i32) -> (i32, i32) {
    %c0_i32 = arith.constant 0 : i32
    %c0_i32_0 = arith.constant 0 : i32
    return %arg0, %c0_i32 : i32, i32
  }
  func.func @transform_2(%arg0: i32) -> (i32, i32) {
    %c0_i32 = arith.constant 0 : i32
    %c0_i32_0 = arith.constant 0 : i32
    return %arg0, %c0_i32 : i32, i32
  }
  func.func @transform_3(%arg0: i32) -> (i32, i32) {
    %c0_i32 = arith.constant 0 : i32
    %c0_i32_0 = arith.constant 0 : i32
    %c0_i32_1 = arith.constant 0 : i32
    return %c0_i32, %c0_i32_0 : i32, i32
  }
  func.func @transform_4(%arg0: i32) -> (i32, i32) {
    %c0_i32 = arith.constant 0 : i32
    %c0_i32_0 = arith.constant 0 : i32
    %c0_i32_1 = arith.constant 0 : i32
    return %c0_i32, %c0_i32_0 : i32, i32
  }
  func.func @transform_5(%arg0: i32) -> (i32, i32) {
    %c0_i32 = arith.constant 0 : i32
    %c0_i32_0 = arith.constant 0 : i32
    return %arg0, %c0_i32 : i32, i32
  }
  func.func @transform_6(%arg0: i32) -> (i32, i32) {
    %c0_i32 = arith.constant 0 : i32
    %c0_i32_0 = arith.constant 0 : i32
    return %c0_i32, %arg0 : i32, i32
  }
}

</mosaic_0001>

<llo_original>
// kernel: tpu_custom_call.1
$region0: #{tpu_custom_call.1}
  #allocation0 [shape = 'u32[]', space=smem, size = 0x4, offset = 0x4, fixed_abs, tag = 'smem constant byte address 0x4 - core index']
  #allocation1 [shape = 'u32[72,128]{1,0:T(1,128)}', space=vmem, size = 0x9000, scoped, tag = 'internal scratch']
  %s0 = inlined_call_operand.vmem [shape: bf16[256,8], index: 0, kind: input, shape index: {}]
  %s1 = inlined_call_operand.vmem [shape: s8[256,256], index: 1, kind: input, shape index: {}]
  %s2 = inlined_call_operand.vmem [shape: f32[256,1], index: 2, kind: input, shape index: {}]
  %s3 = inlined_call_operand.vmem [shape: bf16[16,48], index: 3, kind: input, shape index: {}]
  %s4 = inlined_call_operand.vmem [shape: bf16[8,16], index: 4, kind: input, shape index: {}]
  %s5 = inlined_call_operand.vmem [shape: f32[256,16], index: 5, kind: output, shape index: {0}]
  %s6 = inlined_call_operand.hbm [shape: f32[8,256], index: 6, kind: output, shape index: {1}]
  %7 = xla_tuple %s5, %s6
  %s8 = sld [smem:[#allocation0]]
  $region61: #{tpu_custom_call.1} parent=0
    _
  %s10 = ssub.s32 1, %s8
  %s11 = scalar_select 0, %s10, %s8
  $region1: #{tpu_custom_call.1} parent=0
    #allocation2 [shape = 'u8[8192]{0}', space=vmem, size = 0x2000, scoped, tag = 'output window, operand 1']
    #allocation3 [shape = 's32[2]{0}', space=sflag, size = 0x8, scoped, tag = 'scoped memory for tpu_custom_call.1']
    %12 = vsyncpa [#allocation3], 0
    %s13 = scalar_lea.sflag [#allocation3], 1
    %14 = vsyncpa %s13, 0
    loop: start=0, step=1, limit=4
    $region2: #{tpu_custom_call.1} parent=1 // loop_pre_header
      _
    $region3: #{tpu_custom_call.1} parent=1 // loop_header
      %s16 = sphi 0, %s20
      %p17 = scmp.ge.s32.totalorder %s16, 4
      %s24 = sphi 0, %s24
      %s26 = sphi 0, %s24
      %s27 = sphi 0, %s26
      %s41 = sphi 0, %s27
      %s47 = sphi 0, %s49
      %s50 = sphi 0, %s47
      %s51 = sphi 0, %s50
      %s67 = sphi 0, %s51
      %s73 = sphi 0, %s75
      %s76 = sphi 0, %s73
      %s77 = sphi 0, %s76
      %s93 = sphi 0, %s77
      %s97 = sphi 0, %s97
      %s99 = sphi 0, %s97
      %s100 = sphi 0, %s99
      %s114 = sphi 0, %s100
      %s118 = sphi 0, %s118
      %s120 = sphi 0, %s118
      %s121 = sphi 0, %s120
      %s135 = sphi 0, %s121
      %s141 = sphi 0, %s143
      %s144 = sphi 0, %s141
      %s145 = sphi 0, %s144
      %s161 = sphi 0, %s145
      %s167 = sphi 0, %s169
      %s170 = sphi 0, %s167
      %s171 = sphi 0, %s170
      %s187 = sphi 0, %s171
    $region4: #{tpu_custom_call.1} parent=1 // loop_header_branch
      %19 = sbr.rel (%p17) target = $region8
    $region5: #{tpu_custom_call.1} parent=1 // loop_body
      %s21 = ssub.s32 %s16, 1
      %s22 = ssub.s32 %s16, 2
      %s23 = sadd.s32 %s16, 1
      %s25 = sadd.s32 %s24, 1
      %p28 = scmp.eq.s32.totalorder %s16, 1
      %p29 = scmp.ne.s32.totalorder %s24, %s26
      %p30 = scmp.eq.s32.totalorder %s16, 0
      %p31 = por %p29, %p30
      %p32 = scmp.ne.s32.totalorder %s24, %s26
      %p33 = scmp.eq.s32.totalorder %s21, 1
      %p34 = por %p32, %p33
      %p35 = scmp.ne.s32.totalorder %s26, %s27
      %p36 = scmp.eq.s32.totalorder %s21, 0
      %p37 = por %p35, %p36
      %p38 = scmp.ne.s32.totalorder %s26, %s27
      %p39 = scmp.eq.s32.totalorder %s22, 1
      %p40 = por %p38, %p39
      %p42 = scmp.ne.s32.totalorder %s27, %s41
      %p43 = scmp.eq.s32.totalorder %s22, 0
      %p44 = por %p42, %p43
      %s45 = ssub.s32 %s16, %s23
      %p46 = scmp.eq.s32.totalorder %s45, 0
      %s48 = sadd.s32 %s47, 1
      %s49 = scalar_select %p46, %s47, %s48
      %p52 = pneg %p46
      %p53 = scmp.eq.s32.totalorder %s16, 1
      %p54 = por %p52, %p53
      %p55 = scmp.ne.s32.totalorder %s47, %s50
      %p56 = scmp.eq.s32.totalorder %s16, 0
      %p57 = por %p55, %p56
      %p58 = scmp.ne.s32.totalorder %s47, %s50
      %p59 = scmp.eq.s32.totalorder %s21, 1
      %p60 = por %p58, %p59
      %p61 = scmp.ne.s32.totalorder %s50, %s51
      %p62 = scmp.eq.s32.totalorder %s21, 0
      %p63 = por %p61, %p62
      %p64 = scmp.ne.s32.totalorder %s50, %s51
      %p65 = scmp.eq.s32.totalorder %s22, 1
      %p66 = por %p64, %p65
      %p68 = scmp.ne.s32.totalorder %s51, %s67
      %p69 = scmp.eq.s32.totalorder %s22, 0
      %p70 = por %p68, %p69
      %s71 = ssub.s32 %s16, %s23
      %p72 = scmp.eq.s32.totalorder %s71, 0
      %s74 = sadd.s32 %s73, 1
      %s75 = scalar_select %p72, %s73, %s74
      %p78 = pneg %p72
      %p79 = scmp.eq.s32.totalorder %s16, 1
      %p80 = por %p78, %p79
      %p81 = scmp.ne.s32.totalorder %s73, %s76
      %p82 = scmp.eq.s32.totalorder %s16, 0
      %p83 = por %p81, %p82
      %p84 = scmp.ne.s32.totalorder %s73, %s76
      %p85 = scmp.eq.s32.totalorder %s21, 1
      %p86 = por %p84, %p85
      %p87 = scmp.ne.s32.totalorder %s76, %s77
      %p88 = scmp.eq.s32.totalorder %s21, 0
      %p89 = por %p87, %p88
      %p90 = scmp.ne.s32.totalorder %s76, %s77
      %p91 = scmp.eq.s32.totalorder %s22, 1
      %p92 = por %p90, %p91
      %p94 = scmp.ne.s32.totalorder %s77, %s93
      %p95 = scmp.eq.s32.totalorder %s22, 0
      %p96 = por %p94, %p95
      %s98 = sadd.s32 %s97, 1
      %p101 = scmp.eq.s32.totalorder %s16, 1
      %p102 = scmp.ne.s32.totalorder %s97, %s99
      %p103 = scmp.eq.s32.totalorder %s16, 0
      %p104 = por %p102, %p103
      %p105 = scmp.ne.s32.totalorder %s97, %s99
      %p106 = scmp.eq.s32.totalorder %s21, 1
      %p107 = por %p105, %p106
      %p108 = scmp.ne.s32.totalorder %s99, %s100
      %p109 = scmp.eq.s32.totalorder %s21, 0
      %p110 = por %p108, %p109
      %p111 = scmp.ne.s32.totalorder %s99, %s100
      %p112 = scmp.eq.s32.totalorder %s22, 1
      %p113 = por %p111, %p112
      %p115 = scmp.ne.s32.totalorder %s100, %s114
      %p116 = scmp.eq.s32.totalorder %s22, 0
      %p117 = por %p115, %p116
      %s119 = sadd.s32 %s118, 1
      %p122 = scmp.eq.s32.totalorder %s16, 1
      %p123 = scmp.ne.s32.totalorder %s118, %s120
      %p124 = scmp.eq.s32.totalorder %s16, 0
      %p125 = por %p123, %p124
      %p126 = scmp.ne.s32.totalorder %s118, %s120
      %p127 = scmp.eq.s32.totalorder %s21, 1
      %p128 = por %p126, %p127
      %p129 = scmp.ne.s32.totalorder %s120, %s121
      %p130 = scmp.eq.s32.totalorder %s21, 0
      %p131 = por %p129, %p130
      %p132 = scmp.ne.s32.totalorder %s120, %s121
      %p133 = scmp.eq.s32.totalorder %s22, 1
      %p134 = por %p132, %p133
      %p136 = scmp.ne.s32.totalorder %s121, %s135
      %p137 = scmp.eq.s32.totalorder %s22, 0
      %p138 = por %p136, %p137
      %s139 = ssub.s32 %s16, %s23
      %p140 = scmp.eq.s32.totalorder %s139, 0
      %s142 = sadd.s32 %s141, 1
      %s143 = scalar_select %p140, %s141, %s142
      %p146 = pneg %p140
      %p147 = scmp.eq.s32.totalorder %s16, 1
      %p148 = por %p146, %p147
      %p149 = scmp.ne.s32.totalorder %s141, %s144
      %p150 = scmp.eq.s32.totalorder %s16, 0
      %p151 = por %p149, %p150
      %p152 = scmp.ne.s32.totalorder %s141, %s144
      %p153 = scmp.eq.s32.totalorder %s21, 1
      %p154 = por %p152, %p153
      %p155 = scmp.ne.s32.totalorder %s144, %s145
      %p156 = scmp.eq.s32.totalorder %s21, 0
      %p157 = por %p155, %p156
      %p158 = scmp.ne.s32.totalorder %s144, %s145
      %p159 = scmp.eq.s32.totalorder %s22, 1
      %p160 = por %p158, %p159
      %p162 = scmp.ne.s32.totalorder %s145, %s161
      %p163 = scmp.eq.s32.totalorder %s22, 0
      %p164 = por %p162, %p163
      %s165 = ssub.s32 %s16, %s23
      %p166 = scmp.eq.s32.totalorder %s165, 0
      %s168 = sadd.s32 %s167, 1
      %s169 = scalar_select %p166, %s167, %s168
      %p172 = pneg %p166
      %p173 = scmp.eq.s32.totalorder %s16, 1
      %p174 = por %p172, %p173
      %p175 = scmp.ne.s32.totalorder %s167, %s170
      %p176 = scmp.eq.s32.totalorder %s16, 0
      %p177 = por %p175, %p176
      %p178 = scmp.ne.s32.totalorder %s167, %s170
      %p179 = scmp.eq.s32.totalorder %s21, 1
      %p180 = por %p178, %p179
      %p181 = scmp.ne.s32.totalorder %s170, %s171
      %p182 = scmp.eq.s32.totalorder %s21, 0
      %p183 = por %p181, %p182
      %p184 = scmp.ne.s32.totalorder %s170, %s171
      %p185 = scmp.eq.s32.totalorder %s22, 1
      %p186 = por %p184, %p185
      %p188 = scmp.ne.s32.totalorder %s171, %s187
      %p189 = scmp.eq.s32.totalorder %s22, 0
      %p190 = por %p188, %p189
      %p191 = scmp.le.s32.totalorder 1, %s16
      %p192 = scmp.lt.s32.totalorder %s16, 3
      %p193 = pnand %p191, %p192
      %p194 = pneg %p193
      // Predicated region
      $region9: #{tpu_custom_call.1} parent=5 // pred_check
        _
      $region10: #{tpu_custom_call.1} parent=5 // pred_check_branch
        %196 = sbr.rel (%p193) target = $region12
      $region11: #{tpu_custom_call.1} parent=5 // pred_region
        %s197 = ssub.s32 %s16, 1
        // Predicated region
        $region13: #{tpu_custom_call.1} parent=11 // pred_check
          %p198 = pneg %p37
        $region14: #{tpu_custom_call.1} parent=11 // pred_check_branch
          %200 = sbr.rel (%p198) target = $region16
        $region15: #{tpu_custom_call.1} parent=11 // pred_region
          _
        $region16: #{tpu_custom_call.1} parent=11 // pred_fallthru
          _
        // Predicated region
        $region17: #{tpu_custom_call.1} parent=11 // pred_check
          %p201 = pneg %p110
        $region18: #{tpu_custom_call.1} parent=11 // pred_check_branch
          %203 = sbr.rel (%p201) target = $region20
        $region19: #{tpu_custom_call.1} parent=11 // pred_region
          _
        $region20: #{tpu_custom_call.1} parent=11 // pred_fallthru
          _
        // Predicated region
        $region21: #{tpu_custom_call.1} parent=11 // pred_check
          %p204 = pneg %p131
        $region22: #{tpu_custom_call.1} parent=11 // pred_check_branch
          %206 = sbr.rel (%p204) target = $region24
        $region23: #{tpu_custom_call.1} parent=11 // pred_region
          _
        $region24: #{tpu_custom_call.1} parent=11 // pred_fallthru
          _
      $region12: #{tpu_custom_call.1} parent=5 // pred_fallthru
        _
      %p207 = scmp.lt.s32.totalorder %s16, 2
      // Predicated region
      $region25: #{tpu_custom_call.1} parent=5 // pred_check
        %p208 = pneg %p207
      $region26: #{tpu_custom_call.1} parent=5 // pred_check_branch
        %210 = sbr.rel (%p208) target = $region28
      $region27: #{tpu_custom_call.1} parent=5 // pred_region
        // Predicated region
        $region29: #{tpu_custom_call.1} parent=27 // pred_check
          %p211 = pneg %p57
        $region30: #{tpu_custom_call.1} parent=27 // pred_check_branch
          %213 = sbr.rel (%p211) target = $region32
        $region31: #{tpu_custom_call.1} parent=27 // pred_region
          %s214 = smul.u32 4, %s16
          %p215 = scmp.lt.s32.totalorder %s214, 7
          %s216 = scalar_select %p215, %s214, 7
          %s217 = smul.addr %s216, 2
          %s218 = smul.addr %s217, 8
          %s219 = scalar_lea.vmem %s1, %s218
          %s220 = smul.u32 4, %s16
        $region32: #{tpu_custom_call.1} parent=27 // pred_fallthru
          _
        // Predicated region
        $region33: #{tpu_custom_call.1} parent=27 // pred_check
          %p221 = pneg %p83
        $region34: #{tpu_custom_call.1} parent=27 // pred_check_branch
          %223 = sbr.rel (%p221) target = $region36
        $region35: #{tpu_custom_call.1} parent=27 // pred_region
          %s224 = smul.u32 16, %s16
          %p225 = scmp.lt.s32.totalorder %s224, 31
          %s226 = scalar_select %p225, %s224, 31
          %s227 = smul.addr %s226, 8
          %s228 = scalar_lea.vmem %s2, %s227
          %s229 = smul.u32 16, %s16
        $region36: #{tpu_custom_call.1} parent=27 // pred_fallthru
          _
      $region28: #{tpu_custom_call.1} parent=5 // pred_fallthru
        _
      %p230 = scmp.le.s32.totalorder 1, %s16
      %p231 = scmp.lt.s32.totalorder %s16, 3
      %p232 = pnand %p230, %p231
      %p233 = pneg %p232
      // Predicated region
      $region37: #{tpu_custom_call.1} parent=5 // pred_check
        _
      $region38: #{tpu_custom_call.1} parent=5 // pred_check_branch
        %235 = sbr.rel (%p232) target = $region40
      $region39: #{tpu_custom_call.1} parent=5 // pred_region
        %s236 = ssub.s32 %s16, 1
        %p237 = pneg %p37
        %p238 = pneg %p34
        %s239 = smul.u32 4, %s21
        %p240 = scmp.lt.s32.totalorder %s239, 7
        %s241 = scalar_select %p240, %s239, 7
        %s242 = smul.addr %s241, 2
        %s243 = smul.addr %s242, 8
        %s244 = scalar_lea.vmem %s1, %s243
        %p245 = pneg %p63
        %p246 = pneg %p60
        %s247 = smul.u32 16, %s21
        %p248 = scmp.lt.s32.totalorder %s247, 31
        %s249 = scalar_select %p248, %s247, 31
        %s250 = smul.addr %s249, 8
        %s251 = scalar_lea.vmem %s2, %s250
        %p252 = pneg %p89
        %p253 = pneg %p86
        %p254 = pneg %p110
        %p255 = pneg %p107
        %p256 = pneg %p131
        %p257 = pneg %p128
        %p258 = pneg %p157
        %p259 = pneg %p154
        %s260 = smul.u32 16, %s21
        %p261 = scmp.lt.s32.totalorder %s260, 31
        %s262 = scalar_select %p261, %s260, 31
        %s263 = smul.addr %s262, 8
        %s264 = scalar_lea.vmem %s5, %s263
        %p265 = pneg %p183
        %p266 = pneg %p180
        %s267 = sand.u32 %s170, 1
        %s268 = scalar_lea.sflag [#allocation3], %s267
        %s269 = sand.u32 %s170, 1
        %s270 = smul.addr %s269, 8
        %s271 = scalar_lea.vmem [#allocation2], %s270
        %s272 = smul.u32 4, %s21
        %p273 = scmp.lt.s32.totalorder %s272, 7
        %s274 = scalar_select %p273, %s272, 7
        %s275 = smul.addr %s274, 2
        %s276 = smul.addr %s275, 8
        %s277 = scalar_lea.vmem %s1, %s276
        %s278 = smul.u32 4, %s21
        %s279 = smul.u32 16, %s21
        %p280 = scmp.lt.s32.totalorder %s279, 31
        %s281 = scalar_select %p280, %s279, 31
        %s282 = smul.addr %s281, 8
        %s283 = scalar_lea.vmem %s2, %s282
        %s284 = smul.u32 16, %s21
        %s285 = smul.u32 16, %s21
        %p286 = scmp.lt.s32.totalorder %s285, 31
        %s287 = scalar_select %p286, %s285, 31
        %s288 = smul.addr %s287, 8
        %s289 = scalar_lea.vmem %s5, %s288
        %s290 = smul.u32 16, %s21
        %v292 = vld [vmem:[%s277] sm:$0xff]
        %v293 = vld [vmem:[%s277 + $0x8] sm:$0xff]
        %v294 = vld [vmem:[%s277 + $0x10] sm:$0xff]
        %v295 = vld [vmem:[%s277 + $0x18] sm:$0xff]
        %v296 = vld [vmem:[%s277 + $0x20] sm:$0xff]
        %v297 = vld [vmem:[%s277 + $0x28] sm:$0xff]
        %v298 = vld [vmem:[%s277 + $0x30] sm:$0xff]
        %v299 = vld [vmem:[%s277 + $0x38] sm:$0xff]
        %v300 = vunpack.c.0.s8 %v292
        %v301 = vunpack.c.0.s8 %v293
        %v302 = vunpack.c.1.s8 %v292
        %v303 = vunpack.c.1.s8 %v293
        %v304 = vunpack.c.2.s8 %v292
        %v305 = vunpack.c.2.s8 %v293
        %v306 = vunpack.c.3.s8 %v292
        %v307 = vunpack.c.3.s8 %v293
        %v308 = vunpack.c.0.s8 %v294
        %v309 = vunpack.c.0.s8 %v295
        %v310 = vunpack.c.1.s8 %v294
        %v311 = vunpack.c.1.s8 %v295
        %v312 = vunpack.c.2.s8 %v294
        %v313 = vunpack.c.2.s8 %v295
        %v314 = vunpack.c.3.s8 %v294
        %v315 = vunpack.c.3.s8 %v295
        %v316 = vunpack.c.0.s8 %v296
        %v317 = vunpack.c.0.s8 %v297
        %v318 = vunpack.c.1.s8 %v296
        %v319 = vunpack.c.1.s8 %v297
        %v320 = vunpack.c.2.s8 %v296
        %v321 = vunpack.c.2.s8 %v297
        %v322 = vunpack.c.3.s8 %v296
        %v323 = vunpack.c.3.s8 %v297
        %v324 = vunpack.c.0.s8 %v298
        %v325 = vunpack.c.0.s8 %v299
        %v326 = vunpack.c.1.s8 %v298
        %v327 = vunpack.c.1.s8 %v299
        %v328 = vunpack.c.2.s8 %v298
        %v329 = vunpack.c.2.s8 %v299
        %v330 = vunpack.c.3.s8 %v298
        %v331 = vunpack.c.3.s8 %v299
        %v332 = vcvt.s32.f32 %v300
        %v333 = vcvt.s32.f32 %v301
        %v334 = vcvt.s32.f32 %v302
        %v335 = vcvt.s32.f32 %v303
        %v336 = vcvt.s32.f32 %v304
        %v337 = vcvt.s32.f32 %v305
        %v338 = vcvt.s32.f32 %v306
        %v339 = vcvt.s32.f32 %v307
        %v340 = vcvt.s32.f32 %v308
        %v341 = vcvt.s32.f32 %v309
        %v342 = vcvt.s32.f32 %v310
        %v343 = vcvt.s32.f32 %v311
        %v344 = vcvt.s32.f32 %v312
        %v345 = vcvt.s32.f32 %v313
        %v346 = vcvt.s32.f32 %v314
        %v347 = vcvt.s32.f32 %v315
        %v348 = vcvt.s32.f32 %v316
        %v349 = vcvt.s32.f32 %v317
        %v350 = vcvt.s32.f32 %v318
        %v351 = vcvt.s32.f32 %v319
        %v352 = vcvt.s32.f32 %v320
        %v353 = vcvt.s32.f32 %v321
        %v354 = vcvt.s32.f32 %v322
        %v355 = vcvt.s32.f32 %v323
        %v356 = vcvt.s32.f32 %v324
        %v357 = vcvt.s32.f32 %v325
        %v358 = vcvt.s32.f32 %v326
        %v359 = vcvt.s32.f32 %v327
        %v360 = vcvt.s32.f32 %v328
        %v361 = vcvt.s32.f32 %v329
        %v362 = vcvt.s32.f32 %v330
        %v363 = vcvt.s32.f32 %v331
        %v364 = vpack.c.bf16 %v334, %v332
        %v365 = vpack.c.bf16 %v335, %v333
        %v366 = vpack.c.bf16 %v338, %v336
        %v367 = vpack.c.bf16 %v339, %v337
        %v368 = vpack.c.bf16 %v342, %v340
        %v369 = vpack.c.bf16 %v343, %v341
        %v370 = vpack.c.bf16 %v346, %v344
        %v371 = vpack.c.bf16 %v347, %v345
        %v372 = vpack.c.bf16 %v350, %v348
        %v373 = vpack.c.bf16 %v351, %v349
        %v374 = vpack.c.bf16 %v354, %v352
        %v375 = vpack.c.bf16 %v355, %v353
        %v376 = vpack.c.bf16 %v358, %v356
        %v377 = vpack.c.bf16 %v359, %v357
        %v378 = vpack.c.bf16 %v362, %v360
        %v379 = vpack.c.bf16 %v363, %v361
        %v380 = vld [vmem:[%s0] sm:$0xf]
        %v381 = vld [vmem:[%s0 + $0x4] sm:$0xf]
        %v382 = vld [vmem:[%s0 + $0x8] sm:$0xf]
        %v383 = vld [vmem:[%s0 + $0xc] sm:$0xf]
        %v384 = vld [vmem:[%s0 + $0x10] sm:$0xf]
        %v385 = vld [vmem:[%s0 + $0x14] sm:$0xf]
        %v386 = vld [vmem:[%s0 + $0x18] sm:$0xf]
        %v387 = vld [vmem:[%s0 + $0x1c] sm:$0xf]
        %v388 = vld [vmem:[%s0 + $0x20] sm:$0xf]
        %v389 = vld [vmem:[%s0 + $0x24] sm:$0xf]
        %v390 = vld [vmem:[%s0 + $0x28] sm:$0xf]
        %v391 = vld [vmem:[%s0 + $0x2c] sm:$0xf]
        %v392 = vld [vmem:[%s0 + $0x30] sm:$0xf]
        %v393 = vld [vmem:[%s0 + $0x34] sm:$0xf]
        %v394 = vld [vmem:[%s0 + $0x38] sm:$0xf]
        %v395 = vld [vmem:[%s0 + $0x3c] sm:$0xf]
        %v396 = vld [vmem:[%s0 + $0x40] sm:$0xf]
        %v397 = vld [vmem:[%s0 + $0x44] sm:$0xf]
        %v398 = vld [vmem:[%s0 + $0x48] sm:$0xf]
        %v399 = vld [vmem:[%s0 + $0x4c] sm:$0xf]
        %v400 = vld [vmem:[%s0 + $0x50] sm:$0xf]
        %v401 = vld [vmem:[%s0 + $0x54] sm:$0xf]
        %v402 = vld [vmem:[%s0 + $0x58] sm:$0xf]
        %v403 = vld [vmem:[%s0 + $0x5c] sm:$0xf]
        %v404 = vld [vmem:[%s0 + $0x60] sm:$0xf]
        %v405 = vld [vmem:[%s0 + $0x64] sm:$0xf]
        %v406 = vld [vmem:[%s0 + $0x68] sm:$0xf]
        %v407 = vld [vmem:[%s0 + $0x6c] sm:$0xf]
        %v408 = vld [vmem:[%s0 + $0x70] sm:$0xf]
        %v409 = vld [vmem:[%s0 + $0x74] sm:$0xf]
        %v410 = vld [vmem:[%s0 + $0x78] sm:$0xf]
        %v411 = vld [vmem:[%s0 + $0x7c] sm:$0xf]
        %v444 = vunpack.c.l.b16 %v380
        %v445 = vunpack.c.l.b16 %v381
        %v446 = vunpack.c.l.b16 %v382
        %v447 = vunpack.c.l.b16 %v383
        %v448 = vunpack.c.l.b16 %v384
        %v449 = vunpack.c.l.b16 %v385
        %v450 = vunpack.c.l.b16 %v386
        %v451 = vunpack.c.l.b16 %v387
        %v452 = vunpack.c.l.b16 %v388
        %v453 = vunpack.c.l.b16 %v389
        %v454 = vunpack.c.l.b16 %v390
        %v455 = vunpack.c.l.b16 %v391
        %v456 = vunpack.c.l.b16 %v392
        %v457 = vunpack.c.l.b16 %v393
        %v458 = vunpack.c.l.b16 %v394
        %v459 = vunpack.c.l.b16 %v395
        %v460 = vunpack.c.l.b16 %v396
        %v461 = vunpack.c.l.b16 %v397
        %v462 = vunpack.c.l.b16 %v398
        %v463 = vunpack.c.l.b16 %v399
        %v464 = vunpack.c.l.b16 %v400
        %v465 = vunpack.c.l.b16 %v401
        %v466 = vunpack.c.l.b16 %v402
        %v467 = vunpack.c.l.b16 %v403
        %v468 = vunpack.c.l.b16 %v404
        %v469 = vunpack.c.l.b16 %v405
        %v470 = vunpack.c.l.b16 %v406
        %v471 = vunpack.c.l.b16 %v407
        %v472 = vunpack.c.l.b16 %v408
        %v473 = vunpack.c.l.b16 %v409
        %v474 = vunpack.c.l.b16 %v410
        %v475 = vunpack.c.l.b16 %v411
        %v476 = vpack.c.b16 %v445, %v444
        %v477 = vpack.c.b16 %v447, %v446
        %v478 = vpack.c.b16 %v449, %v448
        %v479 = vpack.c.b16 %v451, %v450
        %v480 = vpack.c.b16 %v453, %v452
        %v481 = vpack.c.b16 %v455, %v454
        %v482 = vpack.c.b16 %v457, %v456
        %v483 = vpack.c.b16 %v459, %v458
        %v484 = vpack.c.b16 %v461, %v460
        %v485 = vpack.c.b16 %v463, %v462
        %v486 = vpack.c.b16 %v465, %v464
        %v487 = vpack.c.b16 %v467, %v466
        %v488 = vpack.c.b16 %v469, %v468
        %v489 = vpack.c.b16 %v471, %v470
        %v490 = vpack.c.b16 %v473, %v472
        %v491 = vpack.c.b16 %v475, %v474
        %508 = vmatpush.bf16.msra.mxu0 %v483
        %509 = vmatpush.bf16.msra.mxu0 %v482
        %510 = vmatpush.bf16.msra.mxu0 %v481
        %511 = vmatpush.bf16.msra.mxu0 %v480
        %512 = vmatpush.bf16.msra.mxu0 %v479
        %513 = vmatpush.bf16.msra.mxu0 %v478
        %514 = vmatpush.bf16.msra.mxu0 %v477
        %515 = vmatpush.bf16.msra.mxu0 %v476
        %516 = vmatmul.bf16.gmra.mxu0 %v364
        %v517 = vpop.f32.mrf.mxu0
        %v518 = vadd.f32 0.0, %v517
        %v519 = vpop.f32.mrf.mxu0
        %v520 = vadd.f32 0.0, %v519
        %521 = vmatmul.bf16.gmra.mxu0 %v366
        %v522 = vpop.f32.mrf.mxu0
        %v523 = vadd.f32 0.0, %v522
        %v524 = vpop.f32.mrf.mxu0
        %v525 = vadd.f32 0.0, %v524
        %526 = vmatmul.bf16.gmra.mxu0 %v368
        %v527 = vpop.f32.mrf.mxu0
        %v528 = vadd.f32 0.0, %v527
        %v529 = vpop.f32.mrf.mxu0
        %v530 = vadd.f32 0.0, %v529
        %531 = vmatmul.bf16.gmra.mxu0 %v370
        %v532 = vpop.f32.mrf.mxu0
        %v533 = vadd.f32 0.0, %v532
        %v534 = vpop.f32.mrf.mxu0
        %v535 = vadd.f32 0.0, %v534
        %536 = vmatmul.bf16.gmra.mxu0 %v372
        %v537 = vpop.f32.mrf.mxu0
        %v538 = vadd.f32 0.0, %v537
        %v539 = vpop.f32.mrf.mxu0
        %v540 = vadd.f32 0.0, %v539
        %541 = vmatmul.bf16.gmra.mxu0 %v374
        %v542 = vpop.f32.mrf.mxu0
        %v543 = vadd.f32 0.0, %v542
        %v544 = vpop.f32.mrf.mxu0
        %v545 = vadd.f32 0.0, %v544
        %546 = vmatmul.bf16.gmra.mxu0 %v376
        %v547 = vpop.f32.mrf.mxu0
        %v548 = vadd.f32 0.0, %v547
        %v549 = vpop.f32.mrf.mxu0
        %v550 = vadd.f32 0.0, %v549
        %551 = vmatmul.bf16.gmra.mxu0 %v378
        %v552 = vpop.f32.mrf.mxu0
        %v553 = vadd.f32 0.0, %v552
        %v554 = vpop.f32.mrf.mxu0
        %v555 = vadd.f32 0.0, %v554
        %556 = vdwg.mxu0
        %557 = vmatpush.bf16.msra.mxu0 %v491
        %558 = vmatpush.bf16.msra.mxu0 %v490
        %559 = vmatpush.bf16.msra.mxu0 %v489
        %560 = vmatpush.bf16.msra.mxu0 %v488
        %561 = vmatpush.bf16.msra.mxu0 %v487
        %562 = vmatpush.bf16.msra.mxu0 %v486
        %563 = vmatpush.bf16.msra.mxu0 %v485
        %564 = vmatpush.bf16.msra.mxu0 %v484
        %565 = vmatmul.bf16.gmra.mxu0 %v365
        %v566 = vpop.f32.mrf.mxu0
        %v567 = vadd.f32 %v518, %v566
        %v568 = vpop.f32.mrf.mxu0
        %v569 = vadd.f32 %v520, %v568
        %570 = vmatmul.bf16.gmra.mxu0 %v367
        %v571 = vpop.f32.mrf.mxu0
        %v572 = vadd.f32 %v523, %v571
        %v573 = vpop.f32.mrf.mxu0
        %v574 = vadd.f32 %v525, %v573
        %575 = vmatmul.bf16.gmra.mxu0 %v369
        %v576 = vpop.f32.mrf.mxu0
        %v577 = vadd.f32 %v528, %v576
        %v578 = vpop.f32.mrf.mxu0
        %v579 = vadd.f32 %v530, %v578
        %580 = vmatmul.bf16.gmra.mxu0 %v371
        %v581 = vpop.f32.mrf.mxu0
        %v582 = vadd.f32 %v533, %v581
        %v583 = vpop.f32.mrf.mxu0
        %v584 = vadd.f32 %v535, %v583
        %585 = vmatmul.bf16.gmra.mxu0 %v373
        %v586 = vpop.f32.mrf.mxu0
        %v587 = vadd.f32 %v538, %v586
        %v588 = vpop.f32.mrf.mxu0
        %v589 = vadd.f32 %v540, %v588
        %590 = vmatmul.bf16.gmra.mxu0 %v375
        %v591 = vpop.f32.mrf.mxu0
        %v592 = vadd.f32 %v543, %v591
        %v593 = vpop.f32.mrf.mxu0
        %v594 = vadd.f32 %v545, %v593
        %595 = vmatmul.bf16.gmra.mxu0 %v377
        %v596 = vpop.f32.mrf.mxu0
        %v597 = vadd.f32 %v548, %v596
        %v598 = vpop.f32.mrf.mxu0
        %v599 = vadd.f32 %v550, %v598
        %600 = vmatmul.bf16.gmra.mxu0 %v379
        %v601 = vpop.f32.mrf.mxu0
        %v602 = vadd.f32 %v553, %v601
        %v603 = vpop.f32.mrf.mxu0
        %v604 = vadd.f32 %v555, %v603
        %605 = vdwg.mxu0
        %v606 = vld [vmem:[%s283] sm:$0xff]
        %v607 = vld [vmem:[%s283 + $0x8] sm:$0xff]
        %v608 = vld [vmem:[%s283 + $0x10] sm:$0xff]
        %v609 = vld [vmem:[%s283 + $0x18] sm:$0xff]
        %v610 = vld [vmem:[%s283 + $0x20] sm:$0xff]
        %v611 = vld [vmem:[%s283 + $0x28] sm:$0xff]
        %v612 = vld [vmem:[%s283 + $0x30] sm:$0xff]
        %v613 = vld [vmem:[%s283 + $0x38] sm:$0xff]
        %v614 = vld [vmem:[%s283 + $0x40] sm:$0xff]
        %v615 = vld [vmem:[%s283 + $0x48] sm:$0xff]
        %v616 = vld [vmem:[%s283 + $0x50] sm:$0xff]
        %v617 = vld [vmem:[%s283 + $0x58] sm:$0xff]
        %v618 = vld [vmem:[%s283 + $0x60] sm:$0xff]
        %v619 = vld [vmem:[%s283 + $0x68] sm:$0xff]
        %v620 = vld [vmem:[%s283 + $0x70] sm:$0xff]
        %v621 = vld [vmem:[%s283 + $0x78] sm:$0xff]
        %623 = vset.pattern.permute.xlu0 0
        %624 = vperm.xlu0 %623, %v606
        %v625 = vpop.permute.xlu0 %624
        %628 = vset.pattern.permute.xlu0 0
        %629 = vperm.xlu0 %628, %v607
        %v630 = vpop.permute.xlu0 %629
        %633 = vset.pattern.permute.xlu0 0
        %634 = vperm.xlu0 %633, %v608
        %v635 = vpop.permute.xlu0 %634
        %638 = vset.pattern.permute.xlu0 0
        %639 = vperm.xlu0 %638, %v609
        %v640 = vpop.permute.xlu0 %639
        %643 = vset.pattern.permute.xlu0 0
        %644 = vperm.xlu0 %643, %v610
        %v645 = vpop.permute.xlu0 %644
        %648 = vset.pattern.permute.xlu0 0
        %649 = vperm.xlu0 %648, %v611
        %v650 = vpop.permute.xlu0 %649
        %653 = vset.pattern.permute.xlu0 0
        %654 = vperm.xlu0 %653, %v612
        %v655 = vpop.permute.xlu0 %654
        %658 = vset.pattern.permute.xlu0 0
        %659 = vperm.xlu0 %658, %v613
        %v660 = vpop.permute.xlu0 %659
        %663 = vset.pattern.permute.xlu0 0
        %664 = vperm.xlu0 %663, %v614
        %v665 = vpop.permute.xlu0 %664
        %668 = vset.pattern.permute.xlu0 0
        %669 = vperm.xlu0 %668, %v615
        %v670 = vpop.permute.xlu0 %669
        %673 = vset.pattern.permute.xlu0 0
        %674 = vperm.xlu0 %673, %v616
        %v675 = vpop.permute.xlu0 %674
        %678 = vset.pattern.permute.xlu0 0
        %679 = vperm.xlu0 %678, %v617
        %v680 = vpop.permute.xlu0 %679
        %683 = vset.pattern.permute.xlu0 0
        %684 = vperm.xlu0 %683, %v618
        %v685 = vpop.permute.xlu0 %684
        %688 = vset.pattern.permute.xlu0 0
        %689 = vperm.xlu0 %688, %v619
        %v690 = vpop.permute.xlu0 %689
        %693 = vset.pattern.permute.xlu0 0
        %694 = vperm.xlu0 %693, %v620
        %v695 = vpop.permute.xlu0 %694
        %698 = vset.pattern.permute.xlu0 0
        %699 = vperm.xlu0 %698, %v621
        %v700 = vpop.permute.xlu0 %699
        %v702 = vmul.f32 %v567, %v625
        %v703 = vmul.f32 %v569, %v630
        %v704 = vmul.f32 %v572, %v635
        %v705 = vmul.f32 %v574, %v640
        %v706 = vmul.f32 %v577, %v645
        %v707 = vmul.f32 %v579, %v650
        %v708 = vmul.f32 %v582, %v655
        %v709 = vmul.f32 %v584, %v660
        %v710 = vmul.f32 %v587, %v665
        %v711 = vmul.f32 %v589, %v670
        %v712 = vmul.f32 %v592, %v675
        %v713 = vmul.f32 %v594, %v680
        %v714 = vmul.f32 %v597, %v685
        %v715 = vmul.f32 %v599, %v690
        %v716 = vmul.f32 %v602, %v695
        %v717 = vmul.f32 %v604, %v700
        %s718 = smul.u32 %s21, 128
        %s719 = sshra.s32 %s718, 3
        %s720 = sand.u32 %s718, 7
        %s721 = smul.addr %s719, 4
        %s722 = scalar_lea.vmem %s0, %s721
        %v723 = vld [vmem:[%s722] sm:$0xf]
        %v724 = vld [vmem:[%s722 + $0x4] sm:$0xf]
        %v725 = vld [vmem:[%s722 + $0x8] sm:$0xf]
        %v726 = vld [vmem:[%s722 + $0xc] sm:$0xf]
        %v727 = vld [vmem:[%s722 + $0x10] sm:$0xf]
        %v728 = vld [vmem:[%s722 + $0x14] sm:$0xf]
        %v729 = vld [vmem:[%s722 + $0x18] sm:$0xf]
        %v730 = vld [vmem:[%s722 + $0x1c] sm:$0xf]
        %v731 = vld [vmem:[%s722 + $0x20] sm:$0xf]
        %v732 = vld [vmem:[%s722 + $0x24] sm:$0xf]
        %v733 = vld [vmem:[%s722 + $0x28] sm:$0xf]
        %v734 = vld [vmem:[%s722 + $0x2c] sm:$0xf]
        %v735 = vld [vmem:[%s722 + $0x30] sm:$0xf]
        %v736 = vld [vmem:[%s722 + $0x34] sm:$0xf]
        %v737 = vld [vmem:[%s722 + $0x38] sm:$0xf]
        %v738 = vld [vmem:[%s722 + $0x3c] sm:$0xf]
        %v739 = vpack.c.bf16 %v702, %v702
        %v740 = vpack.c.bf16 %v703, %v703
        %v741 = vpack.c.bf16 %v704, %v704
        %v742 = vpack.c.bf16 %v705, %v705
        %v743 = vpack.c.bf16 %v706, %v706
        %v744 = vpack.c.bf16 %v707, %v707
        %v745 = vpack.c.bf16 %v708, %v708
        %v746 = vpack.c.bf16 %v709, %v709
        %v747 = vpack.c.bf16 %v710, %v710
        %v748 = vpack.c.bf16 %v711, %v711
        %v749 = vpack.c.bf16 %v712, %v712
        %v750 = vpack.c.bf16 %v713, %v713
        %v751 = vpack.c.bf16 %v714, %v714
        %v752 = vpack.c.bf16 %v715, %v715
        %v753 = vpack.c.bf16 %v716, %v716
        %v754 = vpack.c.bf16 %v717, %v717
        %v771 = vunpack.c.l.b16 %v739
        %v772 = vunpack.c.l.b16 %v740
        %v773 = vunpack.c.l.b16 %v741
        %v774 = vunpack.c.l.b16 %v742
        %v775 = vunpack.c.l.b16 %v743
        %v776 = vunpack.c.l.b16 %v744
        %v777 = vunpack.c.l.b16 %v745
        %v778 = vunpack.c.l.b16 %v746
        %v779 = vunpack.c.l.b16 %v747
        %v780 = vunpack.c.l.b16 %v748
        %v781 = vunpack.c.l.b16 %v749
        %v782 = vunpack.c.l.b16 %v750
        %v783 = vunpack.c.l.b16 %v751
        %v784 = vunpack.c.l.b16 %v752
        %v785 = vunpack.c.l.b16 %v753
        %v786 = vunpack.c.l.b16 %v754
        %v787 = vpack.c.b16 %v772, %v771
        %v788 = vpack.c.b16 %v774, %v773
        %v789 = vpack.c.b16 %v776, %v775
        %v790 = vpack.c.b16 %v778, %v777
        %v791 = vpack.c.b16 %v780, %v779
        %v792 = vpack.c.b16 %v782, %v781
        %v793 = vpack.c.b16 %v784, %v783
        %v794 = vpack.c.b16 %v786, %v785
        %v811 = vunpack.c.l.b16 %v723
        %v812 = vunpack.c.l.b16 %v724
        %v813 = vunpack.c.l.b16 %v725
        %v814 = vunpack.c.l.b16 %v726
        %v815 = vunpack.c.l.b16 %v727
        %v816 = vunpack.c.l.b16 %v728
        %v817 = vunpack.c.l.b16 %v729
        %v818 = vunpack.c.l.b16 %v730
        %v819 = vunpack.c.l.b16 %v731
        %v820 = vunpack.c.l.b16 %v732
        %v821 = vunpack.c.l.b16 %v733
        %v822 = vunpack.c.l.b16 %v734
        %v823 = vunpack.c.l.b16 %v735
        %v824 = vunpack.c.l.b16 %v736
        %v825 = vunpack.c.l.b16 %v737
        %v826 = vunpack.c.l.b16 %v738
        %v827 = vpack.c.b16 %v812, %v811
        %v828 = vpack.c.b16 %v814, %v813
        %v829 = vpack.c.b16 %v816, %v815
        %v830 = vpack.c.b16 %v818, %v817
        %v831 = vpack.c.b16 %v820, %v819
        %v832 = vpack.c.b16 %v822, %v821
        %v833 = vpack.c.b16 %v824, %v823
        %v834 = vpack.c.b16 %v826, %v825
        %835 = vrot.lane.b32.xlu0 %v827, 8
        %v836 = vpop.permute.xlu0 %835
        %837 = vrot.lane.b32.xlu0 %v828, 8
        %v838 = vpop.permute.xlu0 %837
        %839 = vrot.lane.b32.xlu0 %v829, 8
        %v840 = vpop.permute.xlu0 %839
        %841 = vrot.lane.b32.xlu0 %v830, 8
        %v842 = vpop.permute.xlu0 %841
        %843 = vrot.lane.b32.xlu0 %v831, 8
        %v844 = vpop.permute.xlu0 %843
        %845 = vrot.lane.b32.xlu0 %v832, 8
        %v846 = vpop.permute.xlu0 %845
        %847 = vrot.lane.b32.xlu0 %v833, 8
        %v848 = vpop.permute.xlu0 %847
        %849 = vrot.lane.b32.xlu0 %v834, 8
        %v850 = vpop.permute.xlu0 %849
        %vm851 = vcmask 64512
        %v854 = vsel %vm851, %v787, %v836
        %v857 = vsel %vm851, %v788, %v838
        %v860 = vsel %vm851, %v789, %v840
        %v863 = vsel %vm851, %v790, %v842
        %v866 = vsel %vm851, %v791, %v844
        %v869 = vsel %vm851, %v792, %v846
        %v872 = vsel %vm851, %v793, %v848
        %v875 = vsel %vm851, %v794, %v850
        %v876 = vld [vmem:[%s3] sm:$0xf]
        %v877 = vld [vmem:[%s3 + $0x4] sm:$0xf]
        %v880 = vunpack.c.l.b16 %v876
        %v881 = vunpack.c.l.b16 %v877
        %v882 = vpack.c.b16 %v881, %v880
        %vm884 = vcmask 130048
        %v885 = vsel %vm884, %v854, 0
        %v887 = vsel %vm884, %v857, 0
        %v889 = vsel %vm884, %v860, 0
        %v891 = vsel %vm884, %v863, 0
        %v893 = vsel %vm884, %v866, 0
        %v895 = vsel %vm884, %v869, 0
        %v897 = vsel %vm884, %v872, 0
        %v899 = vsel %vm884, %v875, 0
        %901 = vmatpush.bf16.msra.mxu0 0
        %902 = vmatpush.bf16.msra.mxu0 0
        %903 = vmatpush.bf16.msra.mxu0 0
        %904 = vmatpush.bf16.msra.mxu0 0
        %905 = vmatpush.bf16.msra.mxu0 0
        %906 = vmatpush.bf16.msra.mxu0 0
        %907 = vmatpush.bf16.msra.mxu0 0
        %908 = vmatpush.bf16.msra.mxu0 %v882
        %909 = vmatmul.bf16.gmra.mxu0 %v885
        %v910 = vpop.f32.mrf.mxu0
        %v911 = vadd.f32 0.0, %v910
        %v912 = vpop.f32.mrf.mxu0
        %v913 = vadd.f32 0.0, %v912
        %914 = vmatmul.bf16.gmra.mxu0 %v887
        %v915 = vpop.f32.mrf.mxu0
        %v916 = vadd.f32 0.0, %v915
        %v917 = vpop.f32.mrf.mxu0
        %v918 = vadd.f32 0.0, %v917
        %919 = vmatmul.bf16.gmra.mxu0 %v889
        %v920 = vpop.f32.mrf.mxu0
        %v921 = vadd.f32 0.0, %v920
        %v922 = vpop.f32.mrf.mxu0
        %v923 = vadd.f32 0.0, %v922
        %924 = vmatmul.bf16.gmra.mxu0 %v891
        %v925 = vpop.f32.mrf.mxu0
        %v926 = vadd.f32 0.0, %v925
        %v927 = vpop.f32.mrf.mxu0
        %v928 = vadd.f32 0.0, %v927
        %929 = vmatmul.bf16.gmra.mxu0 %v893
        %v930 = vpop.f32.mrf.mxu0
        %v931 = vadd.f32 0.0, %v930
        %v932 = vpop.f32.mrf.mxu0
        %v933 = vadd.f32 0.0, %v932
        %934 = vmatmul.bf16.gmra.mxu0 %v895
        %v935 = vpop.f32.mrf.mxu0
        %v936 = vadd.f32 0.0, %v935
        %v937 = vpop.f32.mrf.mxu0
        %v938 = vadd.f32 0.0, %v937
        %939 = vmatmul.bf16.gmra.mxu0 %v897
        %v940 = vpop.f32.mrf.mxu0
        %v941 = vadd.f32 0.0, %v940
        %v942 = vpop.f32.mrf.mxu0
        %v943 = vadd.f32 0.0, %v942
        %944 = vmatmul.bf16.gmra.mxu0 %v899
        %v945 = vpop.f32.mrf.mxu0
        %v946 = vadd.f32 0.0, %v945
        %v947 = vpop.f32.mrf.mxu0
        %v948 = vadd.f32 0.0, %v947
        %949 = vdwg.mxu0
        %vm950 = vcmp.ge.f32.partialorder %v911, 0.0
        %vm951 = vcmp.ge.f32.partialorder %v913, 0.0
        %vm952 = vcmp.ge.f32.partialorder %v916, 0.0
        %vm953 = vcmp.ge.f32.partialorder %v918, 0.0
        %vm954 = vcmp.ge.f32.partialorder %v921, 0.0
        %vm955 = vcmp.ge.f32.partialorder %v923, 0.0
        %vm956 = vcmp.ge.f32.partialorder %v926, 0.0
        %vm957 = vcmp.ge.f32.partialorder %v928, 0.0
        %vm958 = vcmp.ge.f32.partialorder %v931, 0.0
        %vm959 = vcmp.ge.f32.partialorder %v933, 0.0
        %vm960 = vcmp.ge.f32.partialorder %v936, 0.0
        %vm961 = vcmp.ge.f32.partialorder %v938, 0.0
        %vm962 = vcmp.ge.f32.partialorder %v941, 0.0
        %vm963 = vcmp.ge.f32.partialorder %v943, 0.0
        %vm964 = vcmp.ge.f32.partialorder %v946, 0.0
        %vm965 = vcmp.ge.f32.partialorder %v948, 0.0
        %v966 = vmul.f32 %v911, 0.01
        %v967 = vmul.f32 %v913, 0.01
        %v968 = vmul.f32 %v916, 0.01
        %v969 = vmul.f32 %v918, 0.01
        %v970 = vmul.f32 %v921, 0.01
        %v971 = vmul.f32 %v923, 0.01
        %v972 = vmul.f32 %v926, 0.01
        %v973 = vmul.f32 %v928, 0.01
        %v974 = vmul.f32 %v931, 0.01
        %v975 = vmul.f32 %v933, 0.01
        %v976 = vmul.f32 %v936, 0.01
        %v977 = vmul.f32 %v938, 0.01
        %v978 = vmul.f32 %v941, 0.01
        %v979 = vmul.f32 %v943, 0.01
        %v980 = vmul.f32 %v946, 0.01
        %v981 = vmul.f32 %v948, 0.01
        %v982 = vsel %vm950, %v911, %v966
        %v983 = vsel %vm951, %v913, %v967
        %v984 = vsel %vm952, %v916, %v968
        %v985 = vsel %vm953, %v918, %v969
        %v986 = vsel %vm954, %v921, %v970
        %v987 = vsel %vm955, %v923, %v971
        %v988 = vsel %vm956, %v926, %v972
        %v989 = vsel %vm957, %v928, %v973
        %v990 = vsel %vm958, %v931, %v974
        %v991 = vsel %vm959, %v933, %v975
        %v992 = vsel %vm960, %v936, %v976
        %v993 = vsel %vm961, %v938, %v977
        %v994 = vsel %vm962, %v941, %v978
        %v995 = vsel %vm963, %v943, %v979
        %v996 = vsel %vm964, %v946, %v980
        %v997 = vsel %vm965, %v948, %v981
        %1014 = vrot.lane.b32.xlu0 %v982, 112
        %v1015 = vpop.permute.xlu0 %1014
        %1016 = vrot.lane.b32.xlu0 %v983, 112
        %v1017 = vpop.permute.xlu0 %1016
        %1018 = vrot.lane.b32.xlu0 %v984, 112
        %v1019 = vpop.permute.xlu0 %1018
        %1020 = vrot.lane.b32.xlu0 %v985, 112
        %v1021 = vpop.permute.xlu0 %1020
        %1022 = vrot.lane.b32.xlu0 %v986, 112
        %v1023 = vpop.permute.xlu0 %1022
        %1024 = vrot.lane.b32.xlu0 %v987, 112
        %v1025 = vpop.permute.xlu0 %1024
        %1026 = vrot.lane.b32.xlu0 %v988, 112
        %v1027 = vpop.permute.xlu0 %1026
        %1028 = vrot.lane.b32.xlu0 %v989, 112
        %v1029 = vpop.permute.xlu0 %1028
        %1030 = vrot.lane.b32.xlu0 %v990, 112
        %v1031 = vpop.permute.xlu0 %1030
        %1032 = vrot.lane.b32.xlu0 %v991, 112
        %v1033 = vpop.permute.xlu0 %1032
        %1034 = vrot.lane.b32.xlu0 %v992, 112
        %v1035 = vpop.permute.xlu0 %1034
        %1036 = vrot.lane.b32.xlu0 %v993, 112
        %v1037 = vpop.permute.xlu0 %1036
        %1038 = vrot.lane.b32.xlu0 %v994, 112
        %v1039 = vpop.permute.xlu0 %1038
        %1040 = vrot.lane.b32.xlu0 %v995, 112
        %v1041 = vpop.permute.xlu0 %1040
        %1042 = vrot.lane.b32.xlu0 %v996, 112
        %v1043 = vpop.permute.xlu0 %1042
        %1044 = vrot.lane.b32.xlu0 %v997, 112
        %v1045 = vpop.permute.xlu0 %1044
        %v1062 = vadd.f32 %v982, %v1015
        %v1063 = vadd.f32 %v983, %v1017
        %v1064 = vadd.f32 %v984, %v1019
        %v1065 = vadd.f32 %v985, %v1021
        %v1066 = vadd.f32 %v986, %v1023
        %v1067 = vadd.f32 %v987, %v1025
        %v1068 = vadd.f32 %v988, %v1027
        %v1069 = vadd.f32 %v989, %v1029
        %v1070 = vadd.f32 %v990, %v1031
        %v1071 = vadd.f32 %v991, %v1033
        %v1072 = vadd.f32 %v992, %v1035
        %v1073 = vadd.f32 %v993, %v1037
        %v1074 = vadd.f32 %v994, %v1039
        %v1075 = vadd.f32 %v995, %v1041
        %v1076 = vadd.f32 %v996, %v1043
        %v1077 = vadd.f32 %v997, %v1045
        %1078 = vrot.lane.b32.xlu0 %v982, 96
        %v1079 = vpop.permute.xlu0 %1078
        %1080 = vrot.lane.b32.xlu0 %v983, 96
        %v1081 = vpop.permute.xlu0 %1080
        %1082 = vrot.lane.b32.xlu0 %v984, 96
        %v1083 = vpop.permute.xlu0 %1082
        %1084 = vrot.lane.b32.xlu0 %v985, 96
        %v1085 = vpop.permute.xlu0 %1084
        %1086 = vrot.lane.b32.xlu0 %v986, 96
        %v1087 = vpop.permute.xlu0 %1086
        %1088 = vrot.lane.b32.xlu0 %v987, 96
        %v1089 = vpop.permute.xlu0 %1088
        %1090 = vrot.lane.b32.xlu0 %v988, 96
        %v1091 = vpop.permute.xlu0 %1090
        %1092 = vrot.lane.b32.xlu0 %v989, 96
        %v1093 = vpop.permute.xlu0 %1092
        %1094 = vrot.lane.b32.xlu0 %v990, 96
        %v1095 = vpop.permute.xlu0 %1094
        %1096 = vrot.lane.b32.xlu0 %v991, 96
        %v1097 = vpop.permute.xlu0 %1096
        %1098 = vrot.lane.b32.xlu0 %v992, 96
        %v1099 = vpop.permute.xlu0 %1098
        %1100 = vrot.lane.b32.xlu0 %v993, 96
        %v1101 = vpop.permute.xlu0 %1100
        %1102 = vrot.lane.b32.xlu0 %v994, 96
        %v1103 = vpop.permute.xlu0 %1102
        %1104 = vrot.lane.b32.xlu0 %v995, 96
        %v1105 = vpop.permute.xlu0 %1104
        %1106 = vrot.lane.b32.xlu0 %v996, 96
        %v1107 = vpop.permute.xlu0 %1106
        %1108 = vrot.lane.b32.xlu0 %v997, 96
        %v1109 = vpop.permute.xlu0 %1108
        %v1126 = vadd.f32 %v1062, %v1079
        %v1127 = vadd.f32 %v1063, %v1081
        %v1128 = vadd.f32 %v1064, %v1083
        %v1129 = vadd.f32 %v1065, %v1085
        %v1130 = vadd.f32 %v1066, %v1087
        %v1131 = vadd.f32 %v1067, %v1089
        %v1132 = vadd.f32 %v1068, %v1091
        %v1133 = vadd.f32 %v1069, %v1093
        %v1134 = vadd.f32 %v1070, %v1095
        %v1135 = vadd.f32 %v1071, %v1097
        %v1136 = vadd.f32 %v1072, %v1099
        %v1137 = vadd.f32 %v1073, %v1101
        %v1138 = vadd.f32 %v1074, %v1103
        %v1139 = vadd.f32 %v1075, %v1105
        %v1140 = vadd.f32 %v1076, %v1107
        %v1141 = vadd.f32 %v1077, %v1109
        %1142 = vst.msk [vmem:[%s289] sm:$0xff] %vm884, %v1126
        %1143 = vst.msk [vmem:[%s289 + $0x8] sm:$0xff] %vm884, %v1127
        %1144 = vst.msk [vmem:[%s289 + $0x10] sm:$0xff] %vm884, %v1128
        %1145 = vst.msk [vmem:[%s289 + $0x18] sm:$0xff] %vm884, %v1129
        %1146 = vst.msk [vmem:[%s289 + $0x20] sm:$0xff] %vm884, %v1130
        %1147 = vst.msk [vmem:[%s289 + $0x28] sm:$0xff] %vm884, %v1131
        %1148 = vst.msk [vmem:[%s289 + $0x30] sm:$0xff] %vm884, %v1132
        %1149 = vst.msk [vmem:[%s289 + $0x38] sm:$0xff] %vm884, %v1133
        %1150 = vst.msk [vmem:[%s289 + $0x40] sm:$0xff] %vm884, %v1134
        %1151 = vst.msk [vmem:[%s289 + $0x48] sm:$0xff] %vm884, %v1135
        %1152 = vst.msk [vmem:[%s289 + $0x50] sm:$0xff] %vm884, %v1136
        %1153 = vst.msk [vmem:[%s289 + $0x58] sm:$0xff] %vm884, %v1137
        %1154 = vst.msk [vmem:[%s289 + $0x60] sm:$0xff] %vm884, %v1138
        %1155 = vst.msk [vmem:[%s289 + $0x68] sm:$0xff] %vm884, %v1139
        %1156 = vst.msk [vmem:[%s289 + $0x70] sm:$0xff] %vm884, %v1140
        %1157 = vst.msk [vmem:[%s289 + $0x78] sm:$0xff] %vm884, %v1141
        %v1158 = vld [vmem:[%s4] sm:$0xf]
        %v1160 = vsel %vm884, %v1158, 0
        %1162 = vmatpush.bf16.xpose.msra.mxu0 %v899
        %1163 = vmatpush.bf16.xpose.msra.mxu0 %v897
        %1164 = vmatpush.bf16.xpose.msra.mxu0 %v895
        %1165 = vmatpush.bf16.xpose.msra.mxu0 %v893
        %1166 = vmatpush.bf16.xpose.msra.mxu0 %v891
        %1167 = vmatpush.bf16.xpose.msra.mxu0 %v889
        %1168 = vmatpush.bf16.xpose.msra.mxu0 %v887
        %1169 = vmatpush.bf16.xpose.msra.mxu0 %v885
        %1170 = vmatmul.bf16.gmra.mxu0 %v1160
        %v1171 = vpop.f32.mrf.mxu0
        %v1172 = vadd.f32 0.0, %v1171
        %v1173 = vpop.f32.mrf.mxu0
        %1174 = vdwg.mxu0
        %1175 = vst [vmem:[%s271] sm:$0xff] %v1172
        %s1176 = smul.u32 16, %s21
        %p1177 = scmp.lt.s32.totalorder %s1176, 31
        %s1178 = scalar_select %p1177, %s1176, 31
        %s1179 = smul.addr %s1178, 8
        %s1180 = scalar_lea.vmem %s5, %s1179
        %s1181 = sand.u32 %s170, 1
        %s1182 = scalar_lea.sflag [#allocation3], %s1181
        %s1183 = sand.u32 %s170, 1
        %s1184 = smul.addr %s1183, 8
        %s1185 = scalar_lea.vmem [#allocation2], %s1184
        // Predicated region
        $region41: #{tpu_custom_call.1} parent=39 // pred_check
          %p1186 = pneg %p154
        $region42: #{tpu_custom_call.1} parent=39 // pred_check_branch
          %1188 = sbr.rel (%p1186) target = $region44
        $region43: #{tpu_custom_call.1} parent=39 // pred_region
          %s1189 = smul.u32 16, %s21
        $region44: #{tpu_custom_call.1} parent=39 // pred_fallthru
          _
        // Predicated region
        $region45: #{tpu_custom_call.1} parent=39 // pred_check
          %p1190 = pneg %p180
        $region46: #{tpu_custom_call.1} parent=39 // pred_check_branch
          %1192 = sbr.rel (%p1190) target = $region48
        $region47: #{tpu_custom_call.1} parent=39 // pred_region
          %1194 = vsyncadd %s1182, 0
          %s1195 = smul.addr %s21, 8
          %s1196 = scalar_lea.hbm %s6, %s1195
          %s1198 = sshll.u32 %s1185, 4
          %s1199 = int_to_ptr.vmem [resolvable:$true] %s1198
          %s1200 = sshll.u32 %s1196, 4
          %s1201 = int_to_ptr.hbm [resolvable:$true] %s1200
          %1203 = dma.vmem_to_hbm [thread:$0]  %s1199, 128, %s1201, %s1182
        $region48: #{tpu_custom_call.1} parent=39 // pred_fallthru
          _
      $region40: #{tpu_custom_call.1} parent=5 // pred_fallthru
        _
      %p1204 = scmp.le.s32.totalorder 2, %s16
      // Predicated region
      $region49: #{tpu_custom_call.1} parent=5 // pred_check
        %p1205 = pneg %p1204
      $region50: #{tpu_custom_call.1} parent=5 // pred_check_branch
        %1207 = sbr.rel (%p1205) target = $region52
      $region51: #{tpu_custom_call.1} parent=5 // pred_region
        %s1208 = ssub.s32 %s16, 2
        // Predicated region
        $region53: #{tpu_custom_call.1} parent=51 // pred_check
          %p1209 = pneg %p160
        $region54: #{tpu_custom_call.1} parent=51 // pred_check_branch
          %1211 = sbr.rel (%p1209) target = $region56
        $region55: #{tpu_custom_call.1} parent=51 // pred_region
          %s1212 = smul.u32 16, %s22
          %p1213 = scmp.lt.s32.totalorder %s1212, 31
          %s1214 = scalar_select %p1213, %s1212, 31
          %s1215 = smul.addr %s1214, 8
          %s1216 = scalar_lea.vmem %s5, %s1215
        $region56: #{tpu_custom_call.1} parent=51 // pred_fallthru
          _
        // Predicated region
        $region57: #{tpu_custom_call.1} parent=51 // pred_check
          %p1217 = pneg %p186
        $region58: #{tpu_custom_call.1} parent=51 // pred_check_branch
          %1219 = sbr.rel (%p1217) target = $region60
        $region59: #{tpu_custom_call.1} parent=51 // pred_region
          %s1220 = sand.u32 %s171, 1
          %s1221 = scalar_lea.sflag [#allocation3], %s1220
          %s1222 = sand.u32 %s171, 1
          %s1223 = smul.addr %s1222, 8
          %s1224 = scalar_lea.vmem [#allocation2], %s1223
          %1226 = dma.done %s1221, 128
        $region60: #{tpu_custom_call.1} parent=51 // pred_fallthru
          _
      $region52: #{tpu_custom_call.1} parent=5 // pred_fallthru
        _
    $region6: #{tpu_custom_call.1} parent=1 // loop_footer
      %s20 = sadd.s32 1, %s16
    $region7: #{tpu_custom_call.1} parent=1 // loop_footer_branch
      %15 = sbr.rel target = $region3
    $region8: #{tpu_custom_call.1} parent=1 // loop_exit
      _
    %1227 = vsyncpa [#allocation3], 1
    %s1228 = scalar_lea.sflag [#allocation3], 1
    %1229 = vsyncpa %s1228, 1

</llo_original>
